<compile_context>
chip_gen: v6e
topology: v6e:2x2x1
jax: 0.10.0
libtpu: 0.0.40
codegen_flags: <defaults>
</compile_context>

<pallas_src>
import jax
import jax.numpy as jnp
from jax.experimental import pallas as pl
from jax.experimental.pallas import tpu as pltpu


def _learn_pose_kernel(p_ref, o_ref):
    # p_ref: (8, B) f32   rows = [rx, ry, rz, tx, ty, tz, 0, 0], camera = lane
    # o_ref: (16, B) f32  rows = row-major flattened c2w per camera
    rx = p_ref[0:1, :]
    ry = p_ref[1:2, :]
    rz = p_ref[2:3, :]
    tx = p_ref[3:4, :]
    ty = p_ref[4:5, :]
    tz = p_ref[5:6, :]

    one = jnp.ones_like(rx)
    zero = jnp.zeros_like(rx)

    # --- per-camera scalar chain (hoisted; one EUP pass per camera lane) ---
    n2 = rx * rx + ry * ry + rz * rz              # r . r (exact, used in K@K identity)
    n = jnp.sqrt(n2) + jnp.float32(1e-15)         # |r| + eps (matches the reference)
    a = jnp.sin(n) / n                            # sin(|r|)/|r|
    b = (one - jnp.cos(n)) / (n * n)              # (1-cos(|r|))/|r|^2

    # Rodrigues with skew@skew = r r^T - (r.r) I  (pure element-wise VPU work).
    o_ref[0:1, :] = one + b * (rx * rx - n2)      # R00
    o_ref[1:2, :] = b * (rx * ry) - a * rz        # R01
    o_ref[2:3, :] = b * (rx * rz) + a * ry        # R02
    o_ref[3:4, :] = tx                            # t x
    o_ref[4:5, :] = b * (ry * rx) + a * rz        # R10
    o_ref[5:6, :] = one + b * (ry * ry - n2)      # R11
    o_ref[6:7, :] = b * (ry * rz) - a * rx        # R12
    o_ref[7:8, :] = ty                            # t y
    o_ref[8:9, :] = b * (rz * rx) - a * ry        # R20
    o_ref[9:10, :] = b * (rz * ry) + a * rx       # R21
    o_ref[10:11, :] = one + b * (rz * rz - n2)    # R22
    o_ref[11:12, :] = tz                          # t z
    o_ref[12:13, :] = zero                        # bottom row [0 0 0 1]
    o_ref[13:14, :] = zero
    o_ref[14:15, :] = zero
    o_ref[15:16, :] = one


def _round_up(x, m):
    return ((x + m - 1) // m) * m


def _learn_pose_all(r_params, t_params):
    """(num_cams, 3), (num_cams, 3) -> (num_cams, 4, 4) f32, one pallas_call."""
    num_cams = r_params.shape[0]
    if num_cams >= 256:
        n_blocks = 2                      # one lane block per v7x TensorCore
        n_pad = _round_up(num_cams, 256)
    else:
        n_blocks = 1                      # single step on v5e/v6e / small tables
        n_pad = _round_up(num_cams, 128)
    block_lanes = n_pad // n_blocks

    # Pack parameters camera-major along lanes: (8, n_pad) lane-dense slab.
    packed = jnp.concatenate(
        [r_params.astype(jnp.float32).T, t_params.astype(jnp.float32).T], axis=0)
    packed = jnp.pad(packed, ((0, 2), (0, n_pad - num_cams)))

    slab = pl.pallas_call(
        _learn_pose_kernel,
        out_shape=jax.ShapeDtypeStruct((16, n_pad), jnp.float32),
        grid=(n_blocks,),
        in_specs=[pl.BlockSpec((8, block_lanes), lambda i: (0, i))],
        out_specs=pl.BlockSpec((16, block_lanes), lambda i: (0, i)),
        compiler_params=pltpu.CompilerParams(dimension_semantics=("parallel",)),
    )(packed)

    # Camera i's 16 c2w floats are column i of the slab (row-major order).
    return slab.T[:num_cams].reshape(num_cams, 4, 4)


learn_pose_all = jax.jit(_learn_pose_all)


@jax.jit
def learn_pose_forward(r_params, t_params, cam_id):
    """Module forward: c2w (4, 4) for one cam_id (from the batched kernel)."""
    num_cams = r_params.shape[0]
    cid = jnp.clip(jnp.asarray(cam_id, jnp.int32), 0, num_cams - 1)  # bounds-safe
    return _learn_pose_all(r_params, t_params)[cid]


# --- pure-JAX reference (mirrors the PyTorch code exactly) ---
def _ref_make_c2w(r, t):
    zero = jnp.zeros((), jnp.float32)
    K = jnp.stack([
        jnp.stack([zero, -r[2], r[1]]),
        jnp.stack([r[2], zero, -r[0]]),
        jnp.stack([-r[1], r[0], zero]),
    ])
    n = jnp.linalg.norm(r) + 1e-15
    R = (jnp.eye(3, dtype=jnp.float32)
         + jnp.sin(n) / n * K
         + (1.0 - jnp.cos(n)) / (n ** 2) * (K @ K))
    top = jnp.concatenate([R, t[:, None]], axis=1)
    bottom = jnp.concatenate([jnp.zeros((1, 3), jnp.float32),
                              jnp.ones((1, 1), jnp.float32)], axis=1)
    return jnp.concatenate([top, bottom], axis=0)


_ref_make_c2w_batched = jax.vmap(_ref_make_c2w)


if __name__ == "__main__":
    key = jax.random.PRNGKey(0)
    kr, kt = jax.random.split(key)

    # Small case consistent with the module: 8 cameras, (num_cams, 3) params.
    num_cams = 8
    r_params = 0.2 * jax.random.normal(kr, (num_cams, 3), dtype=jnp.float32)
    t_params = jax.random.normal(kt, (num_cams, 3), dtype=jnp.float32)

    # Batched: all camera poses in one kernel call.
    c2w_all = jax.block_until_ready(learn_pose_all(r_params, t_params))
    ref_all = _ref_make_c2w_batched(r_params, t_params)
    assert c2w_all.shape == (num_cams, 4, 4) and c2w_all.dtype == jnp.float32
    assert jnp.allclose(c2w_all, ref_all, atol=1e-5, rtol=1e-5)

    # Single-camera forward (module semantics), cam_id as a traced device scalar.
    cam_id = jnp.int32(3)
    c2w = jax.block_until_ready(learn_pose_forward(r_params, t_params, cam_id))
    assert c2w.shape == (4, 4) and c2w.dtype == jnp.float32
    assert jnp.allclose(c2w, ref_all[3], atol=1e-5, rtol=1e-5)

    # Zero-parameter (module __init__) case -> identity pose.
    c2w0 = jax.block_until_ready(
        learn_pose_forward(jnp.zeros((num_cams, 3), jnp.float32),
                           jnp.zeros((num_cams, 3), jnp.float32), jnp.int32(0)))
    assert jnp.allclose(c2w0, jnp.eye(4, dtype=jnp.float32), atol=1e-6)

    # Larger camera table exercises the 2-block "parallel" grid path (v7x 2 TCs).
    num_big = 300
    kr2, kt2 = jax.random.split(jax.random.PRNGKey(0))
    r_big = 0.3 * jax.random.normal(kr2, (num_big, 3), dtype=jnp.float32)
    t_big = jax.random.normal(kt2, (num_big, 3), dtype=jnp.float32)
    c2w_big = jax.block_until_ready(learn_pose_all(r_big, t_big))
    ref_big = _ref_make_c2w_batched(r_big, t_big)
    assert jnp.allclose(c2w_big, ref_big, atol=1e-5, rtol=1e-5)

    print("KERNEL_OK")
</pallas_src>

<mosaic_0001>
module attributes {stable_mosaic.version = 11 : i64} {
  func.func @_learn_pose_kernel(%arg0: i32, %arg1: memref<8x128xf32, #tpu.memory_space<vmem>>, %arg2: memref<16x128xf32, #tpu.memory_space<vmem>>) attributes {dimension_semantics = [#tpu.dimension_semantics<parallel>], iteration_bounds = array<i64: 1>, scalar_prefetch = 0 : i64, scratch_operands = 0 : i64, tpu.core_type = #tpu.core_type<tc>, window_params = [{transform_indices = @transform_0, window_bounds = array<i64: 8, 128>}, {transform_indices = @transform_1, window_bounds = array<i64: 16, 128>}]} {
    %c0 = arith.constant 0 : index
    %c0_0 = arith.constant 0 : index
    %0 = vector.load %arg1[%c0, %c0_0] : memref<8x128xf32, #tpu.memory_space<vmem>>, vector<1x128xf32>
    %c1 = arith.constant 1 : index
    %c0_1 = arith.constant 0 : index
    %1 = vector.load %arg1[%c1, %c0_1] : memref<8x128xf32, #tpu.memory_space<vmem>>, vector<1x128xf32>
    %c2 = arith.constant 2 : index
    %c0_2 = arith.constant 0 : index
    %2 = vector.load %arg1[%c2, %c0_2] : memref<8x128xf32, #tpu.memory_space<vmem>>, vector<1x128xf32>
    %c3 = arith.constant 3 : index
    %c0_3 = arith.constant 0 : index
    %3 = vector.load %arg1[%c3, %c0_3] : memref<8x128xf32, #tpu.memory_space<vmem>>, vector<1x128xf32>
    %c4 = arith.constant 4 : index
    %c0_4 = arith.constant 0 : index
    %4 = vector.load %arg1[%c4, %c0_4] : memref<8x128xf32, #tpu.memory_space<vmem>>, vector<1x128xf32>
    %c5 = arith.constant 5 : index
    %c0_5 = arith.constant 0 : index
    %5 = vector.load %arg1[%c5, %c0_5] : memref<8x128xf32, #tpu.memory_space<vmem>>, vector<1x128xf32>
    %cst = arith.constant 1.000000e+00 : f32
    %6 = vector.broadcast %cst : f32 to vector<1x128xf32>
    %cst_6 = arith.constant 0.000000e+00 : f32
    %7 = vector.broadcast %cst_6 : f32 to vector<1x128xf32>
    %8 = arith.mulf %0, %0 : vector<1x128xf32>
    %9 = arith.mulf %1, %1 : vector<1x128xf32>
    %10 = arith.addf %8, %9 : vector<1x128xf32>
    %11 = arith.mulf %2, %2 : vector<1x128xf32>
    %12 = arith.addf %10, %11 : vector<1x128xf32>
    %13 = math.sqrt %12 : vector<1x128xf32>
    %cst_7 = arith.constant 1.000000e-15 : f32
    %14 = vector.broadcast %cst_7 : f32 to vector<1x128xf32>
    %15 = arith.addf %13, %14 : vector<1x128xf32>
    %16 = math.sin %15 : vector<1x128xf32>
    %17 = arith.divf %16, %15 : vector<1x128xf32>
    %18 = math.cos %15 : vector<1x128xf32>
    %19 = arith.subf %6, %18 : vector<1x128xf32>
    %20 = arith.mulf %15, %15 : vector<1x128xf32>
    %21 = arith.divf %19, %20 : vector<1x128xf32>
    %22 = arith.mulf %0, %0 : vector<1x128xf32>
    %23 = arith.subf %22, %12 : vector<1x128xf32>
    %24 = arith.mulf %21, %23 : vector<1x128xf32>
    %25 = arith.addf %6, %24 : vector<1x128xf32>
    %c0_8 = arith.constant 0 : index
    %c0_9 = arith.constant 0 : index
    %26 = vector.load %arg2[%c0_8, %c0_9] : memref<16x128xf32, #tpu.memory_space<vmem>>, vector<1x128xf32>
    tpu.vector_store %arg2[%c0_8, %c0_9], %25 {strides = array<i32>} : memref<16x128xf32, #tpu.memory_space<vmem>>, vector<1x128xf32>,
    %27 = arith.mulf %0, %1 : vector<1x128xf32>
    %28 = arith.mulf %21, %27 : vector<1x128xf32>
    %29 = arith.mulf %17, %2 : vector<1x128xf32>
    %30 = arith.subf %28, %29 : vector<1x128xf32>
    %c1_10 = arith.constant 1 : index
    %c0_11 = arith.constant 0 : index
    %31 = vector.load %arg2[%c1_10, %c0_11] : memref<16x128xf32, #tpu.memory_space<vmem>>, vector<1x128xf32>
    tpu.vector_store %arg2[%c1_10, %c0_11], %30 {strides = array<i32>} : memref<16x128xf32, #tpu.memory_space<vmem>>, vector<1x128xf32>,
    %32 = arith.mulf %0, %2 : vector<1x128xf32>
    %33 = arith.mulf %21, %32 : vector<1x128xf32>
    %34 = arith.mulf %17, %1 : vector<1x128xf32>
    %35 = arith.addf %33, %34 : vector<1x128xf32>
    %c2_12 = arith.constant 2 : index
    %c0_13 = arith.constant 0 : index
    %36 = vector.load %arg2[%c2_12, %c0_13] : memref<16x128xf32, #tpu.memory_space<vmem>>, vector<1x128xf32>
    tpu.vector_store %arg2[%c2_12, %c0_13], %35 {strides = array<i32>} : memref<16x128xf32, #tpu.memory_space<vmem>>, vector<1x128xf32>,
    %c3_14 = arith.constant 3 : index
    %c0_15 = arith.constant 0 : index
    %37 = vector.load %arg2[%c3_14, %c0_15] : memref<16x128xf32, #tpu.memory_space<vmem>>, vector<1x128xf32>
    tpu.vector_store %arg2[%c3_14, %c0_15], %3 {strides = array<i32>} : memref<16x128xf32, #tpu.memory_space<vmem>>, vector<1x128xf32>,
    %38 = arith.mulf %1, %0 : vector<1x128xf32>
    %39 = arith.mulf %21, %38 : vector<1x128xf32>
    %40 = arith.mulf %17, %2 : vector<1x128xf32>
    %41 = arith.addf %39, %40 : vector<1x128xf32>
    %c4_16 = arith.constant 4 : index
    %c0_17 = arith.constant 0 : index
    %42 = vector.load %arg2[%c4_16, %c0_17] : memref<16x128xf32, #tpu.memory_space<vmem>>, vector<1x128xf32>
    tpu.vector_store %arg2[%c4_16, %c0_17], %41 {strides = array<i32>} : memref<16x128xf32, #tpu.memory_space<vmem>>, vector<1x128xf32>,
    %43 = arith.mulf %1, %1 : vector<1x128xf32>
    %44 = arith.subf %43, %12 : vector<1x128xf32>
    %45 = arith.mulf %21, %44 : vector<1x128xf32>
    %46 = arith.addf %6, %45 : vector<1x128xf32>
    %c5_18 = arith.constant 5 : index
    %c0_19 = arith.constant 0 : index
    %47 = vector.load %arg2[%c5_18, %c0_19] : memref<16x128xf32, #tpu.memory_space<vmem>>, vector<1x128xf32>
    tpu.vector_store %arg2[%c5_18, %c0_19], %46 {strides = array<i32>} : memref<16x128xf32, #tpu.memory_space<vmem>>, vector<1x128xf32>,
    %48 = arith.mulf %1, %2 : vector<1x128xf32>
    %49 = arith.mulf %21, %48 : vector<1x128xf32>
    %50 = arith.mulf %17, %0 : vector<1x128xf32>
    %51 = arith.subf %49, %50 : vector<1x128xf32>
    %c6 = arith.constant 6 : index
    %c0_20 = arith.constant 0 : index
    %52 = vector.load %arg2[%c6, %c0_20] : memref<16x128xf32, #tpu.memory_space<vmem>>, vector<1x128xf32>
    tpu.vector_store %arg2[%c6, %c0_20], %51 {strides = array<i32>} : memref<16x128xf32, #tpu.memory_space<vmem>>, vector<1x128xf32>,
    %c7 = arith.constant 7 : index
    %c0_21 = arith.constant 0 : index
    %53 = vector.load %arg2[%c7, %c0_21] : memref<16x128xf32, #tpu.memory_space<vmem>>, vector<1x128xf32>
    tpu.vector_store %arg2[%c7, %c0_21], %4 {strides = array<i32>} : memref<16x128xf32, #tpu.memory_space<vmem>>, vector<1x128xf32>,
    %54 = arith.mulf %2, %0 : vector<1x128xf32>
    %55 = arith.mulf %21, %54 : vector<1x128xf32>
    %56 = arith.mulf %17, %1 : vector<1x128xf32>
    %57 = arith.subf %55, %56 : vector<1x128xf32>
    %c8 = arith.constant 8 : index
    %c0_22 = arith.constant 0 : index
    %58 = vector.load %arg2[%c8, %c0_22] : memref<16x128xf32, #tpu.memory_space<vmem>>, vector<1x128xf32>
    tpu.vector_store %arg2[%c8, %c0_22], %57 {strides = array<i32>} : memref<16x128xf32, #tpu.memory_space<vmem>>, vector<1x128xf32>,
    %59 = arith.mulf %2, %1 : vector<1x128xf32>
    %60 = arith.mulf %21, %59 : vector<1x128xf32>
    %61 = arith.mulf %17, %0 : vector<1x128xf32>
    %62 = arith.addf %60, %61 : vector<1x128xf32>
    %c9 = arith.constant 9 : index
    %c0_23 = arith.constant 0 : index
    %63 = vector.load %arg2[%c9, %c0_23] : memref<16x128xf32, #tpu.memory_space<vmem>>, vector<1x128xf32>
    tpu.vector_store %arg2[%c9, %c0_23], %62 {strides = array<i32>} : memref<16x128xf32, #tpu.memory_space<vmem>>, vector<1x128xf32>,
    %64 = arith.mulf %2, %2 : vector<1x128xf32>
    %65 = arith.subf %64, %12 : vector<1x128xf32>
    %66 = arith.mulf %21, %65 : vector<1x128xf32>
    %67 = arith.addf %6, %66 : vector<1x128xf32>
    %c10 = arith.constant 10 : index
    %c0_24 = arith.constant 0 : index
    %68 = vector.load %arg2[%c10, %c0_24] : memref<16x128xf32, #tpu.memory_space<vmem>>, vector<1x128xf32>
    tpu.vector_store %arg2[%c10, %c0_24], %67 {strides = array<i32>} : memref<16x128xf32, #tpu.memory_space<vmem>>, vector<1x128xf32>,
    %c11 = arith.constant 11 : index
    %c0_25 = arith.constant 0 : index
    %69 = vector.load %arg2[%c11, %c0_25] : memref<16x128xf32, #tpu.memory_space<vmem>>, vector<1x128xf32>
    tpu.vector_store %arg2[%c11, %c0_25], %5 {strides = array<i32>} : memref<16x128xf32, #tpu.memory_space<vmem>>, vector<1x128xf32>,
    %c12 = arith.constant 12 : index
    %c0_26 = arith.constant 0 : index
    %70 = vector.load %arg2[%c12, %c0_26] : memref<16x128xf32, #tpu.memory_space<vmem>>, vector<1x128xf32>
    tpu.vector_store %arg2[%c12, %c0_26], %7 {strides = array<i32>} : memref<16x128xf32, #tpu.memory_space<vmem>>, vector<1x128xf32>,
    %c13 = arith.constant 13 : index
    %c0_27 = arith.constant 0 : index
    %71 = vector.load %arg2[%c13, %c0_27] : memref<16x128xf32, #tpu.memory_space<vmem>>, vector<1x128xf32>
    tpu.vector_store %arg2[%c13, %c0_27], %7 {strides = array<i32>} : memref<16x128xf32, #tpu.memory_space<vmem>>, vector<1x128xf32>,
    %c14 = arith.constant 14 : index
    %c0_28 = arith.constant 0 : index
    %72 = vector.load %arg2[%c14, %c0_28] : memref<16x128xf32, #tpu.memory_space<vmem>>, vector<1x128xf32>
    tpu.vector_store %arg2[%c14, %c0_28], %7 {strides = array<i32>} : memref<16x128xf32, #tpu.memory_space<vmem>>, vector<1x128xf32>,
    %c15 = arith.constant 15 : index
    %c0_29 = arith.constant 0 : index
    %73 = vector.load %arg2[%c15, %c0_29] : memref<16x128xf32, #tpu.memory_space<vmem>>, vector<1x128xf32>
    tpu.vector_store %arg2[%c15, %c0_29], %6 {strides = array<i32>} : memref<16x128xf32, #tpu.memory_space<vmem>>, vector<1x128xf32>,
    return
  }
  func.func @transform_0(%arg0: i32) -> (i32, i32) {
    %c0_i32 = arith.constant 0 : i32
    %c0_i32_0 = arith.constant 0 : i32
    return %c0_i32, %arg0 : i32, i32
  }
  func.func @transform_1(%arg0: i32) -> (i32, i32) {
    %c0_i32 = arith.constant 0 : i32
    %c0_i32_0 = arith.constant 0 : i32
    return %c0_i32, %arg0 : i32, i32
  }
}

</mosaic_0001>

<llo_original>
// kernel: _learn_pose_all.1
$region0: #{_learn_pose_all.1}
  #allocation0 [shape = 'u32[]', space=smem, size = 0x4, offset = 0x4, fixed_abs, tag = 'smem constant byte address 0x4 - core index']
  #allocation1 [shape = 'u32[144,128]{1,0:T(1,128)}', space=vmem, size = 0x12000, scoped, tag = 'internal scratch']
  %s0 = inlined_call_operand.vmem [shape: f32[8,128], index: 0, kind: input, shape index: {}]
  %s1 = inlined_call_operand.hbm [shape: f32[16,128], index: 1, kind: output, shape index: {}]
  %s2 = sld [smem:[#allocation0]]
  $region14: #{_learn_pose_all.1} parent=0
    _
  %s4 = ssub.s32 1, %s2
  %s5 = scalar_select 0, %s4, %s2
  $region1: #{_learn_pose_all.1} parent=0
    #allocation2 [shape = 'u8[8192]{0}', space=vmem, size = 0x2000, scoped, tag = 'output window, operand 0, single buffered']
    #allocation3 [shape = 's32[1]{0}', space=sflag, size = 0x4, scoped, tag = 'scoped memory for _learn_pose_all.1']
    %6 = vsyncpa [#allocation3], 0
    // Predicated region
    $region2: #{_learn_pose_all.1} parent=1 // pred_check
      _
    $region3: #{_learn_pose_all.1} parent=1 // pred_check_branch
      %8 = sbr.rel (0) target = $region5
    $region4: #{_learn_pose_all.1} parent=1 // pred_region
      _
    $region5: #{_learn_pose_all.1} parent=1 // pred_fallthru
      _
    %v9 = vld [vmem:[%s0] sm:$0x1]
    %v10 = vld [vmem:[%s0 + $0x1] sm:$0x1]
    %v11 = vld [vmem:[%s0 + $0x2] sm:$0x1]
    %v12 = vld [vmem:[%s0 + $0x3] sm:$0x1]
    %v13 = vld [vmem:[%s0 + $0x4] sm:$0x1]
    %v14 = vld [vmem:[%s0 + $0x5] sm:$0x1]
    %v15 = vmul.f32 %v9, %v9
    %v16 = vmul.f32 %v10, %v10
    %v17 = vadd.f32 %v15, %v16
    %v18 = vmul.f32 %v11, %v11
    %v19 = vadd.f32 %v17, %v18
    %v20 = vrsqrt.pop %v19
    %v21 = vmul.f32 %v19, %v20
    %vm22 = vcmp.eq.f32.partialorder %v19, inf
    %v23 = vsel %vm22, %v19, %v21
    %vm24 = vcmp.eq.f32.partialorder %v19, 0.0
    %v25 = vand.u32 %v19, 2147483648
    %v26 = vsel %vm24, %v25, %v23
    %v27 = vadd.f32 %v26, 1e-15
    %v28 = vand.u32 2147483647, %v27
    %vm29 = vcmp.le.f32.partialorder %v28, 0.7853982
    %vm30 = vcmp.lt.s32.totalorder %v27, 0
    %v31 = vand.u32 %v27, 2139095040
    %v32 = vshrl.u32 %v31, 23
    %v33 = vsub.s32 %v32, 127
    %v34 = vand.u32 2147483647, %v27
    %v35 = vand.u32 %v34, 8388607
    %v36 = vor.u32 %v35, 8388608
    %v37 = vsub.s32 0, %v36
    %v38 = vadd.s32 %v33, 1
    %vm39 = vcmp.gt.s32.totalorder %v38, 0
    %v40 = vsel %vm39, %v38, 0
    %v41 = vshrl.u32 %v40, 5
    %v42 = vand.u32 %v40, 31
    %v43 = vsub.s32 32, %v42
    %v44 = vshrl.u32 683565275, %v43
    %v45 = vshll.u32 683565275, %v42
    %v46 = vshrl.u32 2475754826, %v43
    %v47 = vor.u32 %v45, %v46
    %v48 = vshll.u32 2475754826, %v42
    %v49 = vshrl.u32 2131351028, %v43
    %v50 = vor.u32 %v48, %v49
    %v51 = vshll.u32 2131351028, %v42
    %v52 = vshrl.u32 2102212464, %v43
    %v53 = vor.u32 %v51, %v52
    %v54 = vshll.u32 2102212464, %v42
    %v55 = vshrl.u32 920167782, %v43
    %v56 = vor.u32 %v54, %v55
    %v57 = vshll.u32 920167782, %v42
    %v58 = vshrl.u32 1326507024, %v43
    %v59 = vor.u32 %v57, %v58
    %vm60 = vcmp.lt.s32.totalorder %v41, 1
    %vm61 = vcmp.lt.s32.totalorder %v41, 2
    %vm62 = vcmp.lt.s32.totalorder %v41, 3
    %vm63 = vcmp.lt.s32.totalorder %v41, 4
    %v64 = vsel %vm60, %v44, %v47
    %v65 = vsel %vm63, %v53, 2102212464
    %v66 = vsel %vm62, %v50, %v65
    %v67 = vsel %vm61, %v64, %v66
    %v68 = vsel %vm60, %v47, %v50
    %v69 = vsel %vm63, %v56, 920167782
    %v70 = vsel %vm62, %v53, %v69
    %v71 = vsel %vm61, %v68, %v70
    %v72 = vsel %vm60, %v50, %v53
    %v73 = vsel %vm63, %v59, 1326507024
    %v74 = vsel %vm62, %v56, %v73
    %v75 = vsel %vm61, %v72, %v74
    %v76 = vshll.u32 %v36, 8
    %v77 = vmul.u32.u64.compose %v76, %v75
    %v78 = vextract.low.u32 %v77
    %v79 = vextract.high.u32 %v77
    %v80 = vmul.u32.u64.compose %v76, %v71
    %v81 = vextract.low.u32 %v80
    %v82 = vextract.high.u32 %v80
    %v83 = vmul.u32 %v76, %v67
    %v84 = vadd.s32 %v79, %v81
    %vm85 = vc.u32 %v79, %v81
    %v86 = vadd.s32 %v82, 1
    %v87 = vsel %vm85, %v86, %v82
    %v88 = vadd.s32 %v83, %v87
    %v89 = vadd.s32 %v88, 536870912
    %v90 = vshrl.u32 %v89, 30
    %v91 = vshll.u32 %v90, 30
    %v92 = vsub.s32 %v88, %v91
    %vm93 = vcmp.lt.s32.totalorder %v92, 0
    %v94 = vsub.s32 0, %v92
    %v95 = vsel %vm93, %v94, %v92
    %v96 = vclz %v95
    %v97 = vsub.s32 %v96, 2
    %vm98 = vcmp.gt.s32.totalorder 0, %v97
    %v99 = vsel %vm98, 0, %v97
    %v100 = vsub.s32 32, %v99
    %v101 = vshll.u32 %v92, %v99
    %v102 = vshrl.u32 %v84, %v100
    %v103 = vor.u32 %v101, %v102
    %v104 = vsub.s32 4294967266, %v99
    %v105 = vadd.s32 %v104, 127
    %v106 = vshll.u32 %v105, 23
    %v107 = vor.u32 4788187, %v106
    %v108 = vand.u32 2147483647, %v107
    %v110 = vcvt.s32.f32 %v103
    %v111 = vmul.f32 %v110, %v108
    %v112 = vxor.u32 %v111, 2147483648
    %v113 = vsel %vm30, %v112, %v111
    %v114 = vsub.s32 4, %v90
    %v115 = vsel %vm30, %v114, %v90
    %v116 = vsel %vm29, %v27, %v113
    %v117 = vsel %vm29, 0, %v115
    %v118 = vcosq.f32.pop %v116
    %v119 = vsinq.f32.pop %v116
    %vm120 = vweird.f32 %v27
    %v121 = vadd.s32 %v117, 3
    %v122 = vand.u32 %v121, 3
    %vm123 = vcmp.lt.s32.totalorder %v122, 2
    %vm124 = vcmp.eq.s32.totalorder %v122, 0
    %v125 = vxor.u32 %v119, 2147483648
    %v126 = vsel %vm124, %v118, %v125
    %vm127 = vcmp.eq.s32.totalorder %v122, 2
    %v128 = vxor.u32 %v118, 2147483648
    %v129 = vsel %vm127, %v128, %v119
    %v130 = vsel %vm123, %v126, %v129
    %v131 = vsel %vm120, nan, %v130
    %v132 = vrcp.pop %v27
    %v133 = vmul.f32 %v131, %v132
    %v134 = vand.u32 2147483647, %v27
    %vm135 = vcmp.le.f32.partialorder %v134, 0.7853982
    %vm136 = vcmp.lt.s32.totalorder %v27, 0
    %v137 = vand.u32 %v27, 2139095040
    %v138 = vshrl.u32 %v137, 23
    %v139 = vsub.s32 %v138, 127
    %v140 = vand.u32 2147483647, %v27
    %v141 = vand.u32 %v140, 8388607
    %v142 = vor.u32 %v141, 8388608
    %v143 = vsub.s32 0, %v142
    %v144 = vadd.s32 %v139, 1
    %vm145 = vcmp.gt.s32.totalorder %v144, 0
    %v146 = vsel %vm145, %v144, 0
    %v147 = vshrl.u32 %v146, 5
    %v148 = vand.u32 %v146, 31
    %v149 = vsub.s32 32, %v148
    %v150 = vshrl.u32 683565275, %v149
    %v151 = vshll.u32 683565275, %v148
    %v152 = vshrl.u32 2475754826, %v149
    %v153 = vor.u32 %v151, %v152
    %v154 = vshll.u32 2475754826, %v148
    %v155 = vshrl.u32 2131351028, %v149
    %v156 = vor.u32 %v154, %v155
    %v157 = vshll.u32 2131351028, %v148
    %v158 = vshrl.u32 2102212464, %v149
    %v159 = vor.u32 %v157, %v158
    %v160 = vshll.u32 2102212464, %v148
    %v161 = vshrl.u32 920167782, %v149
    %v162 = vor.u32 %v160, %v161
    %v163 = vshll.u32 920167782, %v148
    %v164 = vshrl.u32 1326507024, %v149
    %v165 = vor.u32 %v163, %v164
    %vm166 = vcmp.lt.s32.totalorder %v147, 1
    %vm167 = vcmp.lt.s32.totalorder %v147, 2
    %vm168 = vcmp.lt.s32.totalorder %v147, 3
    %vm169 = vcmp.lt.s32.totalorder %v147, 4
    %v170 = vsel %vm166, %v150, %v153
    %v171 = vsel %vm169, %v159, 2102212464
    %v172 = vsel %vm168, %v156, %v171
    %v173 = vsel %vm167, %v170, %v172
    %v174 = vsel %vm166, %v153, %v156
    %v175 = vsel %vm169, %v162, 920167782
    %v176 = vsel %vm168, %v159, %v175
    %v177 = vsel %vm167, %v174, %v176
    %v178 = vsel %vm166, %v156, %v159
    %v179 = vsel %vm169, %v165, 1326507024
    %v180 = vsel %vm168, %v162, %v179
    %v181 = vsel %vm167, %v178, %v180
    %v182 = vshll.u32 %v142, 8
    %v183 = vmul.u32.u64.compose %v182, %v181
    %v184 = vextract.low.u32 %v183
    %v185 = vextract.high.u32 %v183
    %v186 = vmul.u32.u64.compose %v182, %v177
    %v187 = vextract.low.u32 %v186
    %v188 = vextract.high.u32 %v186
    %v189 = vmul.u32 %v182, %v173
    %v190 = vadd.s32 %v185, %v187
    %vm191 = vc.u32 %v185, %v187
    %v192 = vadd.s32 %v188, 1
    %v193 = vsel %vm191, %v192, %v188
    %v194 = vadd.s32 %v189, %v193
    %v195 = vadd.s32 %v194, 536870912
    %v196 = vshrl.u32 %v195, 30
    %v197 = vshll.u32 %v196, 30
    %v198 = vsub.s32 %v194, %v197
    %vm199 = vcmp.lt.s32.totalorder %v198, 0
    %v200 = vsub.s32 0, %v198
    %v201 = vsel %vm199, %v200, %v198
    %v202 = vclz %v201
    %v203 = vsub.s32 %v202, 2
    %vm204 = vcmp.gt.s32.totalorder 0, %v203
    %v205 = vsel %vm204, 0, %v203
    %v206 = vsub.s32 32, %v205
    %v207 = vshll.u32 %v198, %v205
    %v208 = vshrl.u32 %v190, %v206
    %v209 = vor.u32 %v207, %v208
    %v210 = vsub.s32 4294967266, %v205
    %v211 = vadd.s32 %v210, 127
    %v212 = vshll.u32 %v211, 23
    %v213 = vor.u32 4788187, %v212
    %v214 = vand.u32 2147483647, %v213
    %v216 = vcvt.s32.f32 %v209
    %v217 = vmul.f32 %v216, %v214
    %v218 = vxor.u32 %v217, 2147483648
    %v219 = vsel %vm136, %v218, %v217
    %v220 = vsub.s32 4, %v196
    %v221 = vsel %vm136, %v220, %v196
    %v222 = vsel %vm135, %v27, %v219
    %v223 = vsel %vm135, 0, %v221
    %v224 = vcosq.f32.pop %v222
    %v225 = vsinq.f32.pop %v222
    %vm226 = vweird.f32 %v27
    %v227 = vand.u32 %v223, 3
    %vm228 = vcmp.lt.s32.totalorder %v227, 2
    %vm229 = vcmp.eq.s32.totalorder %v227, 0
    %v230 = vxor.u32 %v225, 2147483648
    %v231 = vsel %vm229, %v224, %v230
    %vm232 = vcmp.eq.s32.totalorder %v227, 2
    %v233 = vxor.u32 %v224, 2147483648
    %v234 = vsel %vm232, %v233, %v225
    %v235 = vsel %vm228, %v231, %v234
    %v236 = vsel %vm226, nan, %v235
    %v237 = vsub.f32 1.0, %v236
    %v238 = vmul.f32 %v27, %v27
    %v239 = vrcp.pop %v238
    %v240 = vmul.f32 %v237, %v239
    %v241 = vsub.f32 %v15, %v19
    %v242 = vmul.f32 %v240, %v241
    %v243 = vadd.f32 %v242, 1.0
    %244 = vst [vmem:[#allocation2] sm:$0x1] %v243
    %v245 = vmul.f32 %v9, %v10
    %v246 = vmul.f32 %v240, %v245
    %v247 = vmul.f32 %v133, %v11
    %v248 = vsub.f32 %v246, %v247
    %249 = vst [vmem:[#allocation2 + $0x1] sm:$0x1] %v248
    %v250 = vmul.f32 %v9, %v11
    %v251 = vmul.f32 %v240, %v250
    %v252 = vmul.f32 %v133, %v10
    %v253 = vadd.f32 %v251, %v252
    %254 = vst [vmem:[#allocation2 + $0x2] sm:$0x1] %v253
    %255 = vst [vmem:[#allocation2 + $0x3] sm:$0x1] %v12
    %v256 = vadd.f32 %v246, %v247
    %257 = vst [vmem:[#allocation2 + $0x4] sm:$0x1] %v256
    %v258 = vsub.f32 %v16, %v19
    %v259 = vmul.f32 %v240, %v258
    %v260 = vadd.f32 %v259, 1.0
    %261 = vst [vmem:[#allocation2 + $0x5] sm:$0x1] %v260
    %v262 = vmul.f32 %v10, %v11
    %v263 = vmul.f32 %v240, %v262
    %v264 = vmul.f32 %v133, %v9
    %v265 = vsub.f32 %v263, %v264
    %266 = vst [vmem:[#allocation2 + $0x6] sm:$0x1] %v265
    %267 = vst [vmem:[#allocation2 + $0x7] sm:$0x1] %v13
    %v268 = vsub.f32 %v251, %v252
    %269 = vst [vmem:[#allocation2 + $0x8] sm:$0x1] %v268
    %v270 = vadd.f32 %v263, %v264
    %271 = vst [vmem:[#allocation2 + $0x9] sm:$0x1] %v270
    %v272 = vsub.f32 %v18, %v19
    %v273 = vmul.f32 %v240, %v272
    %v274 = vadd.f32 %v273, 1.0
    %275 = vst [vmem:[#allocation2 + $0xa] sm:$0x1] %v274
    %276 = vst [vmem:[#allocation2 + $0xb] sm:$0x1] %v14
    %277 = vst [vmem:[#allocation2 + $0xc] sm:$0x1] 0.0
    %278 = vst [vmem:[#allocation2 + $0xd] sm:$0x1] 0.0
    %279 = vst [vmem:[#allocation2 + $0xe] sm:$0x1] 0.0
    %280 = vst [vmem:[#allocation2 + $0xf] sm:$0x1] 1.0
    // Predicated region
    $region6: #{_learn_pose_all.1} parent=1 // pred_check
      _
    $region7: #{_learn_pose_all.1} parent=1 // pred_check_branch
      %282 = sbr.rel (0) target = $region9
    $region8: #{_learn_pose_all.1} parent=1 // pred_region
      %s284 = ssub.s32 256, 256
      %285 = vsyncadd [#allocation3], %s284
      %s286 = sshll.u32 [#allocation2], 4
      %s287 = int_to_ptr.vmem [resolvable:$true] %s286
      %292 = dma.vmem_to_hbm [thread:$0]  %s287, 256, %s1, [#allocation3], 128, 128, 8
    $region9: #{_learn_pose_all.1} parent=1 // pred_fallthru
      _
    // Predicated region
    $region10: #{_learn_pose_all.1} parent=1 // pred_check
      _
    $region11: #{_learn_pose_all.1} parent=1 // pred_check_branch
      %294 = sbr.rel (0) target = $region13
    $region12: #{_learn_pose_all.1} parent=1 // pred_region
      %295 = dma.done [#allocation3], 256
    $region13: #{_learn_pose_all.1} parent=1 // pred_fallthru
      _
    %296 = vsyncpa [#allocation3], 1

</llo_original>
